<compile_context>
chip_gen: v7x
topology: tpu7x:2x2x1
jax: 0.10.0
libtpu: 0.0.40
codegen_flags: <defaults>
</compile_context>

<pallas_src>
import functools
import math

import jax
import jax.numpy as jnp
from jax.experimental import pallas as pl
from jax.experimental.pallas import tpu as pltpu


def dcnn_kernel(adjt_ref, s_ref, xt_ref, w_ref, fcw_ref, fcb_ref, out_ref,
                ax_ref, lhs_ref, acc_ref, *, nhop, lane_tile):
    h = pl.program_id(0)                               # hop (outer, serial)
    j = pl.program_id(1)                               # node-column tile
    col = pl.multiple_of(j * lane_tile, lane_tile)
    cur = h % 2                                        # slot holding (A^h X)^T
    nxt = 1 - cur

    # Hop 0, first tile: seed the diffusion state with X^T.
    @pl.when(jnp.logical_and(h == 0, j == 0))
    def _():
        ax_ref[0] = xt_ref[...]

    # Once per hop (not needed on the last): stage the bf16 LHS of the
    # recurrence with the exact column scale folded in:
    #   (A^{h+1} X)^T = ((A^h X)^T * diag(1/(deg+1))) @ adj^T
    @pl.when(jnp.logical_and(j == 0, h < nhop))
    def _():
        lhs_ref[...] = (ax_ref[cur] * s_ref[...]).astype(lhs_ref.dtype)

    ax_tile = ax_ref[cur, :, pl.ds(col, lane_tile)]            # [Fp, tn] f32

    # Z_h tile (f32 tanh) and its dense-layer contribution; bias seeds the acc.
    z_tile = jnp.tanh(ax_tile * w_ref[h])                      # [Fp, tn] f32

    @pl.when(h == 0)
    def _():
        acc_ref[:, pl.ds(col, lane_tile)] = jnp.broadcast_to(
            fcb_ref[...], (acc_ref.shape[0], lane_tile))

    acc_ref[:, pl.ds(col, lane_tile)] += jnp.dot(
        fcw_ref[h], z_tile, preferred_element_type=jnp.float32)

    # Diffusion recurrence for the next hop (skipped on the last hop).
    @pl.when(h < nhop)
    def _():
        ax_ref[nxt, :, pl.ds(col, lane_tile)] = jnp.dot(
            lhs_ref[...], adjt_ref[...], preferred_element_type=jnp.float32)

    # Last hop: log-softmax over classes (sublane axis) and write the tile.
    @pl.when(h == nhop)
    def _():
        logits = acc_ref[:, pl.ds(col, lane_tile)]
        m = jnp.max(logits, axis=0, keepdims=True)
        sh = logits - m
        lse = jnp.log(jnp.sum(jnp.exp(sh), axis=0, keepdims=True))
        out_ref[...] = (sh - lse).astype(out_ref.dtype)


def _round_up(v, m):
    return (v + m - 1) // m * m


def _vmem_capacity_bytes():
    try:
        info = pltpu.get_tpu_info()
        cap = getattr(info, "vmem_capacity_bytes", None)
        if cap:
            return int(cap)
    except Exception:
        pass
    return 64 * 1024 * 1024          # conservative: one v7x TensorCore


def net_dcnn_forward(x, adj, weight_matrix, fc_w, fc_b, *, nhop):
    """x: [N, F] node features; adj: [N, N] dense 0/1 adjacency."""
    n, nfeat = x.shape
    nclass = fc_w.shape[1]
    h1 = nhop + 1

    # Exact normalisation factorisation: A_norm = adj . diag(1/(deg+1))
    # (same as A_to_diffusion_kernel with add_one=True).
    deg = adj.sum(axis=0)
    s = (1.0 / (deg + 1.0)).astype(jnp.float32)

    # Padding: nodes to a lane multiple, features to a sublane multiple,
    # classes to a full 8-sublane group.
    n_pad = _round_up(max(n, 128), 128)
    f_pad = _round_up(max(nfeat, 8), 8)
    c_pad = _round_up(max(nclass, 8), 8)

    # --- VMEM budget / lane-tile selection -------------------------------
    cap = _vmem_capacity_bytes()
    headroom = 8 << 20
    resident = 2 * (8 * n_pad * 4                               # scale row
                    + f_pad * n_pad * 4                         # X^T
                    + h1 * f_pad * 128 * 4                      # per-hop W
                    + h1 * c_pad * _round_up(f_pad, 128) * 4    # fc weight
                    + c_pad * 128 * 4)                          # fc bias
    scratch = (2 * f_pad * n_pad * 4                            # ax ping-pong
               + f_pad * n_pad * 2                              # bf16 LHS
               + c_pad * n_pad * 4)                             # logits acc
    lane_tile = 128
    for cand in (2048, 1024, 512, 256):                         # largest that fits
        streamed = 2 * n_pad * cand * 2 + 2 * c_pad * cand * 4
        if n_pad % cand == 0 and resident + scratch + streamed + headroom <= cap:
            lane_tile = cand
            break
    streamed = 2 * n_pad * lane_tile * 2 + 2 * c_pad * lane_tile * 4
    needed = resident + scratch + streamed
    vmem_limit = int(min(max(cap - (4 << 20), 16 << 20),
                         max(needed + (4 << 20), 16 << 20)))

    # --- layout plumbing (XLA, outside the kernel): transpose + zero-pad ---
    adjt = jnp.zeros((n_pad, n_pad), jnp.bfloat16)
    adjt = adjt.at[:n, :n].set(adj.T.astype(jnp.bfloat16))       # 0/1 -> exact
    s_row = jnp.ones((1, n_pad), jnp.float32).at[0, :n].set(s)
    xt = jnp.zeros((f_pad, n_pad), jnp.float32)
    xt = xt.at[:nfeat, :n].set(x.T.astype(jnp.float32))
    w3 = jnp.zeros((h1, f_pad, 1), jnp.float32)
    w3 = w3.at[:, :nfeat, 0].set(weight_matrix.astype(jnp.float32))
    fcw3 = jnp.zeros((h1, c_pad, f_pad), jnp.float32)
    fcw3 = fcw3.at[:, :nclass, :nfeat].set(
        fc_w.reshape(h1, nfeat, nclass).transpose(0, 2, 1).astype(jnp.float32))
    fcb_col = jnp.full((c_pad, 1), -1e30, jnp.float32)
    fcb_col = fcb_col.at[:nclass, 0].set(fc_b.reshape(-1).astype(jnp.float32))

    n_tiles = n_pad // lane_tile
    last = nhop

    kern = functools.partial(dcnn_kernel, nhop=nhop, lane_tile=lane_tile)
    out_t = pl.pallas_call(
        kern,
        out_shape=jax.ShapeDtypeStruct((c_pad, n_pad), jnp.float32),
        grid_spec=pltpu.PrefetchScalarGridSpec(
            num_scalar_prefetch=0,
            grid=(h1, n_tiles),
            in_specs=[
                # streamed A^T column tiles; pinned to tile 0 on the last hop
                # so the final pass over A is never fetched.
                pl.BlockSpec((n_pad, lane_tile),
                             lambda h, j: (0, jnp.where(h == last, 0, j))),
                pl.BlockSpec((1, n_pad), lambda h, j: (0, 0)),
                pl.BlockSpec((f_pad, n_pad), lambda h, j: (0, 0)),
                pl.BlockSpec((h1, f_pad, 1), lambda h, j: (0, 0, 0)),
                pl.BlockSpec((h1, c_pad, f_pad), lambda h, j: (0, 0, 0)),
                pl.BlockSpec((c_pad, 1), lambda h, j: (0, 0)),
            ],
            out_specs=pl.BlockSpec(
                (c_pad, lane_tile),
                # resident/unused until the last hop, then one tile per step.
                lambda h, j: (0, jnp.where(h == last, j, 0))),
            scratch_shapes=[
                pltpu.VMEM((2, f_pad, n_pad), jnp.float32),   # (A^h X)^T ping-pong
                pltpu.VMEM((f_pad, n_pad), jnp.bfloat16),     # scaled bf16 LHS
                pltpu.VMEM((c_pad, n_pad), jnp.float32),      # logits accumulator
            ]),
        compiler_params=pltpu.CompilerParams(
            # hop carries the recurrence; the tile axis shares ax/lhs/acc
            # scratch, so both axes stay serial on one core.
            dimension_semantics=("arbitrary", "arbitrary"),
            vmem_limit_bytes=vmem_limit),
    )(adjt, s_row, xt, w3, fcw3, fcb_col)

    return out_t[:nclass, :n].T                        # [N, C] log-probabilities


def net_dcnn_reference(x, adj, weight_matrix, fc_w, fc_b, *, nhop):
    """Pure-JAX f32 reference mirroring the PyTorch forward."""
    n, _ = x.shape
    d = adj.sum(axis=0)
    a_norm = adj / (d + 1.0)[None, :]
    apow = [jnp.eye(n, dtype=jnp.float32)]
    for _ in range(nhop):
        apow.append(a_norm @ apow[-1])
    kernel = jnp.stack(apow, axis=0).transpose(1, 0, 2)          # (N, H+1, N)
    apow_dot_x = jnp.einsum('ijk,kl->ijl', kernel, x)            # (N, H+1, F)
    z = jnp.tanh(apow_dot_x * weight_matrix[None])               # (N, H+1, F)
    z = z.reshape(n, -1)                                         # (N, (H+1)*F)
    logits = z @ fc_w + fc_b[0]
    return jax.nn.log_softmax(logits, axis=1)


if __name__ == "__main__":
    N, F, HOPS, C = 128, 16, 3, 4
    H1 = HOPS + 1

    key = jax.random.PRNGKey(0)
    kx, kw, kfw, kfb = jax.random.split(key, 4)

    # Node features
    x = jax.random.normal(kx, (N, F), dtype=jnp.float32)

    # Deterministic small graph: ring of N nodes plus two chords (symmetric 0/1).
    idx = jnp.arange(N)
    adj = jnp.zeros((N, N), dtype=jnp.float32)
    adj = adj.at[idx, (idx + 1) % N].set(1.0)
    adj = adj.at[(idx + 1) % N, idx].set(1.0)
    adj = adj.at[0, N // 2].set(1.0).at[N // 2, 0].set(1.0)
    adj = adj.at[3, 3 * N // 4].set(1.0).at[3 * N // 4, 3].set(1.0)

    # Parameters (deterministic init mirroring reset_parameters / nn.Linear default).
    stdv = 1.0 / math.sqrt(F)
    weight_matrix = jax.random.uniform(kw, (H1, F), jnp.float32, -stdv, stdv)
    stdv_fc = 1.0 / math.sqrt(H1 * F)
    fc_w = jax.random.uniform(kfw, (H1 * F, C), jnp.float32, -stdv_fc, stdv_fc)
    fc_b = jax.random.uniform(kfb, (1, C), jnp.float32, -stdv_fc, stdv_fc)

    out = net_dcnn_forward(x, adj, weight_matrix, fc_w, fc_b, nhop=HOPS)
    out = jax.block_until_ready(out)

    ref = net_dcnn_reference(x, adj, weight_matrix, fc_w, fc_b, nhop=HOPS)
    assert out.shape == (N, C)
    # Only remaining quantisation: the [F,N] diffusion state is cast to bf16
    # once per hop for the MXU (A itself is exact 0/1 bf16).
    assert jnp.allclose(out, ref, atol=1e-2, rtol=1e-2), (out, ref)

    print("KERNEL_OK")
</pallas_src>

<mosaic_0001>
module attributes {stable_mosaic.version = 11 : i64} {
  func.func @dcnn_kernel(%arg0: i32, %arg1: i32, %arg2: memref<128x128xbf16, #tpu.memory_space<vmem>>, %arg3: memref<1x128xf32, #tpu.memory_space<vmem>>, %arg4: memref<16x128xf32, #tpu.memory_space<vmem>>, %arg5: memref<4x16x1xf32, #tpu.memory_space<vmem>>, %arg6: memref<4x8x16xf32, #tpu.memory_space<vmem>>, %arg7: memref<8x1xf32, #tpu.memory_space<vmem>>, %arg8: memref<8x128xf32, #tpu.memory_space<vmem>>, %arg9: memref<2x16x128xf32, #tpu.memory_space<vmem>>, %arg10: memref<16x128xbf16, #tpu.memory_space<vmem>>, %arg11: memref<8x128xf32, #tpu.memory_space<vmem>>) attributes {dimension_semantics = [#tpu.dimension_semantics<arbitrary>, #tpu.dimension_semantics<arbitrary>], iteration_bounds = array<i64: 4, 1>, scalar_prefetch = 0 : i64, scratch_operands = 3 : i64, tpu.core_type = #tpu.core_type<tc>, window_params = [{transform_indices = @transform_0, window_bounds = array<i64: 128, 128>}, {pipeline_mode = #tpu.pipeline_mode<synchronous>, transform_indices = @transform_1, window_bounds = array<i64: 1, 128>}, {pipeline_mode = #tpu.pipeline_mode<synchronous>, transform_indices = @transform_2, window_bounds = array<i64: 16, 128>}, {pipeline_mode = #tpu.pipeline_mode<synchronous>, transform_indices = @transform_3, window_bounds = array<i64: 4, 16, 1>}, {pipeline_mode = #tpu.pipeline_mode<synchronous>, transform_indices = @transform_4, window_bounds = array<i64: 4, 8, 16>}, {pipeline_mode = #tpu.pipeline_mode<synchronous>, transform_indices = @transform_5, window_bounds = array<i64: 8, 1>}, {transform_indices = @transform_6, window_bounds = array<i64: 8, 128>}]} {
    %c128_i32 = arith.constant 128 : i32
    %0 = arith.muli %arg1, %c128_i32 : i32
    %1 = tpu.assume_multiple %0, 128 : i32
    %c2_i32 = arith.constant 2 : i32
    %c0_i32 = arith.constant 0 : i32
    %2 = arith.cmpi eq, %c2_i32, %c0_i32 : i32
    %c1_i32 = arith.constant 1 : i32
    %3 = arith.select %2, %c1_i32, %c2_i32 : i32
    %4 = arith.remsi %arg0, %3 : i32
    %c0_i32_0 = arith.constant 0 : i32
    %5 = arith.cmpi ne, %4, %c0_i32_0 : i32
    %c0_i32_1 = arith.constant 0 : i32
    %6 = arith.cmpi slt, %4, %c0_i32_1 : i32
    %c0_i32_2 = arith.constant 0 : i32
    %7 = arith.cmpi slt, %3, %c0_i32_2 : i32
    %8 = arith.xori %6, %7 : i1
    %9 = arith.andi %8, %5 : i1
    %10 = arith.addi %4, %3 : i32
    %11 = arith.select %9, %10, %4 : i32
    %c1_i32_3 = arith.constant 1 : i32
    %12 = arith.subi %c1_i32_3, %11 : i32
    %c0_i32_4 = arith.constant 0 : i32
    %13 = arith.cmpi eq, %arg0, %c0_i32_4 : i32
    %c0_i32_5 = arith.constant 0 : i32
    %14 = arith.cmpi eq, %arg1, %c0_i32_5 : i32
    %15 = arith.andi %13, %14 : i1
    %16 = arith.extui %15 : i1 to i32
    %c0_i32_6 = arith.constant 0 : i32
    %17 = arith.cmpi ne, %16, %c0_i32_6 : i32
    scf.if %17 {
      %c0_21 = arith.constant 0 : index
      %c0_22 = arith.constant 0 : index
      %51 = vector.load %arg4[%c0_21, %c0_22] : memref<16x128xf32, #tpu.memory_space<vmem>>, vector<16x128xf32>
      %c0_23 = arith.constant 0 : index
      %c0_24 = arith.constant 0 : index
      %c0_25 = arith.constant 0 : index
      %52 = vector.load %arg9[%c0_23, %c0_24, %c0_25] : memref<2x16x128xf32, #tpu.memory_space<vmem>>, vector<1x16x128xf32>
      %53 = vector.shape_cast %52 : vector<1x16x128xf32> to vector<16x128xf32>
      %54 = vector.shape_cast %51 : vector<16x128xf32> to vector<1x16x128xf32>
      tpu.vector_store %arg9[%c0_23, %c0_24, %c0_25], %54 {strides = array<i32>} : memref<2x16x128xf32, #tpu.memory_space<vmem>>, vector<1x16x128xf32>,
    } else {
    }
    %c0_i32_7 = arith.constant 0 : i32
    %18 = arith.cmpi eq, %arg1, %c0_i32_7 : i32
    %c3_i32 = arith.constant 3 : i32
    %19 = arith.cmpi slt, %arg0, %c3_i32 : i32
    %20 = arith.andi %18, %19 : i1
    %21 = arith.extui %20 : i1 to i32
    %c0_i32_8 = arith.constant 0 : i32
    %22 = arith.cmpi ne, %21, %c0_i32_8 : i32
    scf.if %22 {
      %51 = arith.index_cast %11 : i32 to index
      %c0_21 = arith.constant 0 : index
      %c0_22 = arith.constant 0 : index
      %52 = vector.load %arg9[%51, %c0_21, %c0_22] : memref<2x16x128xf32, #tpu.memory_space<vmem>>, vector<1x16x128xf32>
      %53 = vector.shape_cast %52 : vector<1x16x128xf32> to vector<16x128xf32>
      %c0_23 = arith.constant 0 : index
      %c0_24 = arith.constant 0 : index
      %54 = vector.load %arg3[%c0_23, %c0_24] : memref<1x128xf32, #tpu.memory_space<vmem>>, vector<1x128xf32>
      %55 = vector.broadcast %54 : vector<1x128xf32> to vector<16x128xf32>
      %56 = arith.mulf %53, %55 : vector<16x128xf32>
      %57 = arith.truncf %56 : vector<16x128xf32> to vector<16x128xbf16>
      %c0_25 = arith.constant 0 : index
      %c0_26 = arith.constant 0 : index
      %58 = vector.load %arg10[%c0_25, %c0_26] : memref<16x128xbf16, #tpu.memory_space<vmem>>, vector<16x128xbf16>
      tpu.vector_store %arg10[%c0_25, %c0_26], %57 {strides = array<i32>} : memref<16x128xbf16, #tpu.memory_space<vmem>>, vector<16x128xbf16>,
    } else {
    }
    %23 = arith.index_cast %11 : i32 to index
    %c0 = arith.constant 0 : index
    %24 = arith.index_cast %1 : i32 to index
    %25 = vector.load %arg9[%23, %c0, %24] : memref<2x16x128xf32, #tpu.memory_space<vmem>>, vector<1x16x128xf32>
    %26 = vector.shape_cast %25 : vector<1x16x128xf32> to vector<16x128xf32>
    %27 = arith.index_cast %arg0 : i32 to index
    %c0_9 = arith.constant 0 : index
    %c0_10 = arith.constant 0 : index
    %28 = vector.load %arg5[%27, %c0_9, %c0_10] : memref<4x16x1xf32, #tpu.memory_space<vmem>>, vector<1x16x1xf32>
    %29 = vector.shape_cast %28 : vector<1x16x1xf32> to vector<16x1xf32>
    %30 = vector.broadcast %29 : vector<16x1xf32> to vector<16x128xf32>
    %31 = arith.mulf %26, %30 : vector<16x128xf32>
    %32 = math.tanh %31 : vector<16x128xf32>
    %c0_i32_11 = arith.constant 0 : i32
    %33 = arith.cmpi eq, %arg0, %c0_i32_11 : i32
    %34 = arith.extui %33 : i1 to i32
    %c0_i32_12 = arith.constant 0 : i32
    %35 = arith.cmpi ne, %34, %c0_i32_12 : i32
    scf.if %35 {
      %c0_21 = arith.constant 0 : index
      %c0_22 = arith.constant 0 : index
      %51 = vector.load %arg7[%c0_21, %c0_22] : memref<8x1xf32, #tpu.memory_space<vmem>>, vector<8x1xf32>
      %52 = vector.shape_cast %51 : vector<8x1xf32> to vector<8x1xf32>
      %53 = vector.broadcast %52 : vector<8x1xf32> to vector<8x128xf32>
      %c0_23 = arith.constant 0 : index
      %54 = arith.index_cast %1 : i32 to index
      %55 = vector.load %arg11[%c0_23, %54] : memref<8x128xf32, #tpu.memory_space<vmem>>, vector<8x128xf32>
      tpu.vector_store %arg11[%c0_23, %54], %53 {strides = array<i32>} : memref<8x128xf32, #tpu.memory_space<vmem>>, vector<8x128xf32>,
    } else {
    }
    %c0_13 = arith.constant 0 : index
    %36 = arith.index_cast %1 : i32 to index
    %37 = vector.load %arg11[%c0_13, %36] : memref<8x128xf32, #tpu.memory_space<vmem>>, vector<8x128xf32>
    %38 = arith.index_cast %arg0 : i32 to index
    %c0_14 = arith.constant 0 : index
    %c0_15 = arith.constant 0 : index
    %39 = vector.load %arg6[%38, %c0_14, %c0_15] : memref<4x8x16xf32, #tpu.memory_space<vmem>>, vector<1x8x16xf32>
    %40 = vector.shape_cast %39 : vector<1x8x16xf32> to vector<8x16xf32>
    %cst = arith.constant dense<0.000000e+00> : vector<8x128xf32>
    %41 = tpu.matmul %40, %32, %cst {dimension_numbers = #tpu.dot_dimension_numbers<[1], [0], [0], [1], [0, 0, 1, 1], [], []>} : vector<8x16xf32>, vector<16x128xf32>, vector<8x128xf32> -> vector<8x128xf32>
    %42 = arith.addf %37, %41 : vector<8x128xf32>
    %c0_16 = arith.constant 0 : index
    %43 = arith.index_cast %1 : i32 to index
    %44 = vector.load %arg11[%c0_16, %43] : memref<8x128xf32, #tpu.memory_space<vmem>>, vector<8x128xf32>
    tpu.vector_store %arg11[%c0_16, %43], %42 {strides = array<i32>} : memref<8x128xf32, #tpu.memory_space<vmem>>, vector<8x128xf32>,
    %c3_i32_17 = arith.constant 3 : i32
    %45 = arith.cmpi slt, %arg0, %c3_i32_17 : i32
    %46 = arith.extui %45 : i1 to i32
    %c0_i32_18 = arith.constant 0 : i32
    %47 = arith.cmpi ne, %46, %c0_i32_18 : i32
    scf.if %47 {
      %c0_21 = arith.constant 0 : index
      %c0_22 = arith.constant 0 : index
      %51 = vector.load %arg10[%c0_21, %c0_22] : memref<16x128xbf16, #tpu.memory_space<vmem>>, vector<16x128xbf16>
      %c0_23 = arith.constant 0 : index
      %c0_24 = arith.constant 0 : index
      %52 = vector.load %arg2[%c0_23, %c0_24] : memref<128x128xbf16, #tpu.memory_space<vmem>>, vector<128x128xbf16>
      %cst_25 = arith.constant dense<0.000000e+00> : vector<16x128xf32>
      %53 = tpu.matmul %51, %52, %cst_25 {dimension_numbers = #tpu.dot_dimension_numbers<[1], [0], [0], [1], [0, 0, 1, 1], [], []>} : vector<16x128xbf16>, vector<128x128xbf16>, vector<16x128xf32> -> vector<16x128xf32>
      %54 = arith.index_cast %12 : i32 to index
      %c0_26 = arith.constant 0 : index
      %55 = arith.index_cast %1 : i32 to index
      %56 = vector.load %arg9[%54, %c0_26, %55] : memref<2x16x128xf32, #tpu.memory_space<vmem>>, vector<1x16x128xf32>
      %57 = vector.shape_cast %56 : vector<1x16x128xf32> to vector<16x128xf32>
      %58 = vector.shape_cast %53 : vector<16x128xf32> to vector<1x16x128xf32>
      tpu.vector_store %arg9[%54, %c0_26, %55], %58 {strides = array<i32>} : memref<2x16x128xf32, #tpu.memory_space<vmem>>, vector<1x16x128xf32>,
    } else {
    }
    %c3_i32_19 = arith.constant 3 : i32
    %48 = arith.cmpi eq, %arg0, %c3_i32_19 : i32
    %49 = arith.extui %48 : i1 to i32
    %c0_i32_20 = arith.constant 0 : i32
    %50 = arith.cmpi ne, %49, %c0_i32_20 : i32
    scf.if %50 {
      %c0_21 = arith.constant 0 : index
      %51 = arith.index_cast %1 : i32 to index
      %52 = vector.load %arg11[%c0_21, %51] : memref<8x128xf32, #tpu.memory_space<vmem>>, vector<8x128xf32>
      %cst_22 = arith.constant dense<0xFF800000> : vector<128xf32>
      %53 = vector.multi_reduction <maximumf>, %52, %cst_22 [0] : vector<8x128xf32> to vector<128xf32>
      %54 = vector.shape_cast %53 : vector<128xf32> to vector<1x128xf32>
      %55 = vector.broadcast %54 : vector<1x128xf32> to vector<8x128xf32>
      %56 = arith.subf %52, %55 : vector<8x128xf32>
      %57 = math.exp %56 : vector<8x128xf32>
      %cst_23 = arith.constant dense<0.000000e+00> : vector<128xf32>
      %58 = vector.multi_reduction <add>, %57, %cst_23 [0] : vector<8x128xf32> to vector<128xf32>
      %59 = vector.shape_cast %58 : vector<128xf32> to vector<1x128xf32>
      %60 = math.log %59 : vector<1x128xf32>
      %61 = vector.broadcast %60 : vector<1x128xf32> to vector<8x128xf32>
      %62 = arith.subf %56, %61 : vector<8x128xf32>
      %c0_24 = arith.constant 0 : index
      %c0_25 = arith.constant 0 : index
      %63 = vector.load %arg8[%c0_24, %c0_25] : memref<8x128xf32, #tpu.memory_space<vmem>>, vector<8x128xf32>
      tpu.vector_store %arg8[%c0_24, %c0_25], %62 {strides = array<i32>} : memref<8x128xf32, #tpu.memory_space<vmem>>, vector<8x128xf32>,
    } else {
    }
    return
  }
  func.func @transform_0(%arg0: i32, %arg1: i32) -> (i32, i32) {
    %c3_i32 = arith.constant 3 : i32
    %0 = arith.cmpi eq, %arg0, %c3_i32 : i32
    %c0_i32 = arith.constant 0 : i32
    %1 = arith.select %0, %c0_i32, %arg1 : i32
    %c0_i32_0 = arith.constant 0 : i32
    %c0_i32_1 = arith.constant 0 : i32
    return %c0_i32_0, %1 : i32, i32
  }
  func.func @transform_1(%arg0: i32, %arg1: i32) -> (i32, i32) {
    %c0_i32 = arith.constant 0 : i32
    %c0_i32_0 = arith.constant 0 : i32
    %c0_i32_1 = arith.constant 0 : i32
    return %c0_i32, %c0_i32_0 : i32, i32
  }
  func.func @transform_2(%arg0: i32, %arg1: i32) -> (i32, i32) {
    %c0_i32 = arith.constant 0 : i32
    %c0_i32_0 = arith.constant 0 : i32
    %c0_i32_1 = arith.constant 0 : i32
    return %c0_i32, %c0_i32_0 : i32, i32
  }
  func.func @transform_3(%arg0: i32, %arg1: i32) -> (i32, i32, i32) {
    %c0_i32 = arith.constant 0 : i32
    %c0_i32_0 = arith.constant 0 : i32
    %c0_i32_1 = arith.constant 0 : i32
    %c0_i32_2 = arith.constant 0 : i32
    return %c0_i32, %c0_i32_0, %c0_i32_1 : i32, i32, i32
  }
  func.func @transform_4(%arg0: i32, %arg1: i32) -> (i32, i32, i32) {
    %c0_i32 = arith.constant 0 : i32
    %c0_i32_0 = arith.constant 0 : i32
    %c0_i32_1 = arith.constant 0 : i32
    %c0_i32_2 = arith.constant 0 : i32
    return %c0_i32, %c0_i32_0, %c0_i32_1 : i32, i32, i32
  }
  func.func @transform_5(%arg0: i32, %arg1: i32) -> (i32, i32) {
    %c0_i32 = arith.constant 0 : i32
    %c0_i32_0 = arith.constant 0 : i32
    %c0_i32_1 = arith.constant 0 : i32
    return %c0_i32, %c0_i32_0 : i32, i32
  }
  func.func @transform_6(%arg0: i32, %arg1: i32) -> (i32, i32) {
    %c3_i32 = arith.constant 3 : i32
    %0 = arith.cmpi eq, %arg0, %c3_i32 : i32
    %c0_i32 = arith.constant 0 : i32
    %1 = arith.select %0, %arg1, %c0_i32 : i32
    %c0_i32_0 = arith.constant 0 : i32
    %c0_i32_1 = arith.constant 0 : i32
    return %c0_i32_0, %1 : i32, i32
  }
}

</mosaic_0001>

<llo_original>
// kernel: tpu_custom_call.1
$region0: #{tpu_custom_call.1}
  #allocation0 [shape = 'u32[]', space=smem, size = 0x4, offset = 0x4, fixed_abs, tag = 'smem constant byte address 0x4 - core index']
  #allocation1 [shape = 'u32[144,128]{1,0:T(1,128)}', space=vmem, size = 0x12000, scoped, tag = 'internal scratch']
  #allocation2 [shape = 'f32[2,16,128]{2,1,0:T(8,128)}', space=vmem, size = 0x4000, scoped, tag = 'scratch operand']
  #allocation3 [shape = 'bf16[16,128]{1,0:T(16,128)(2,1)}', space=vmem, size = 0x1000, scoped, tag = 'scratch operand']
  #allocation4 [shape = 'f32[8,128]{1,0:T(8,128)}', space=vmem, size = 0x1000, scoped, tag = 'scratch operand']
  %s0 = inlined_call_operand.vmem [shape: bf16[128,128], index: 0, kind: input, shape index: {}]
  %s1 = inlined_call_operand.hbm [shape: f32[1,128], index: 1, kind: input, shape index: {}]
  %s2 = inlined_call_operand.vmem [shape: f32[16,128], index: 2, kind: input, shape index: {}]
  %s3 = inlined_call_operand.vmem [shape: f32[4,16,1], index: 3, kind: input, shape index: {}]
  %s4 = inlined_call_operand.hbm [shape: f32[4,8,16], index: 4, kind: input, shape index: {}]
  %s5 = inlined_call_operand.vmem [shape: f32[8,1], index: 5, kind: input, shape index: {}]
  %s6 = inlined_call_operand.hbm [shape: f32[8,128], index: 6, kind: output, shape index: {}]
  %s7 = sld [smem:[#allocation0]]
  $region85: #{tpu_custom_call.1} parent=0
    _
  %s9 = ssub.s32 1, %s7
  %s10 = scalar_select 0, %s9, %s7
  $region1: #{tpu_custom_call.1} parent=0
    #allocation5 [shape = 'u8[512]{0}', space=vmem, size = 0x400, scoped, tag = 'input window, operand 1, single buffered']
    #allocation6 [shape = 's32[2]{0}', space=sflag, size = 0x8, scoped, tag = 'scoped memory for tpu_custom_call.1']
    #allocation7 [shape = 's32[2]{0}', space=sflag, size = 0x8, scoped, tag = 'scoped memory for tpu_custom_call.1']
    #allocation8 [shape = 'u8[16384]{0}', space=vmem, size = 0x4000, scoped, tag = 'input window, operand 4, single buffered']
    #allocation9 [shape = 's32[1]{0}', space=sflag, size = 0x4, scoped, tag = 'scoped memory for tpu_custom_call.1']
    #allocation10 [shape = 'u8[8192]{0}', space=vmem, size = 0x2000, scoped, tag = 'output window, operand 0']
    %11 = vsyncpa [#allocation6], 0
    %12 = vsyncpa [#allocation9], 0
    %13 = vsyncpa [#allocation7], 0
    %s14 = scalar_lea.sflag [#allocation7], 1
    %15 = vsyncpa %s14, 0
    loop: start=0, step=1, limit=6
    $region2: #{tpu_custom_call.1} parent=1 // loop_pre_header
      _
    $region3: #{tpu_custom_call.1} parent=1 // loop_header
      %s17 = sphi 0, %s21
      %p18 = scmp.ge.s32.totalorder %s17, 6
      %s24 = sphi 0, %s36
      %s25 = sphi 0, %s32
      %s26 = sphi 0, %s24
      %s27 = sphi 0, %s25
      %s28 = sphi 0, %s26
      %s29 = sphi 0, %s27
      %s43 = sphi 0, %s45
      %s46 = sphi 0, %s43
      %s47 = sphi 0, %s46
      %s63 = sphi 0, %s47
      %s67 = sphi 0, %s67
      %s69 = sphi 0, %s67
      %s70 = sphi 0, %s69
      %s84 = sphi 0, %s70
      %s88 = sphi 0, %s88
      %s90 = sphi 0, %s88
      %s91 = sphi 0, %s90
      %s105 = sphi 0, %s91
      %s109 = sphi 0, %s109
      %s111 = sphi 0, %s109
      %s112 = sphi 0, %s111
      %s126 = sphi 0, %s112
      %s130 = sphi 0, %s130
      %s132 = sphi 0, %s130
      %s133 = sphi 0, %s132
      %s147 = sphi 0, %s133
      %s151 = sphi 0, %s151
      %s153 = sphi 0, %s151
      %s154 = sphi 0, %s153
      %s168 = sphi 0, %s154
      %s178 = sphi 0, %s180
      %s181 = sphi 0, %s178
      %s182 = sphi 0, %s181
      %s198 = sphi 0, %s182
    $region4: #{tpu_custom_call.1} parent=1 // loop_header_branch
      %20 = sbr.rel (%p18) target = $region8
    $region5: #{tpu_custom_call.1} parent=1 // loop_body
      %s22 = ssub.s32 %s17, 1
      %s23 = ssub.s32 %s17, 2
      %s30 = sadd.s32 1, %s25
      %p31 = scmp.ge.s32.totalorder %s30, 1
      %s32 = scalar_select %p31, 0, %s30
      %s33 = sadd.s32 1, %s24
      %s34 = scalar_select %p31, %s33, %s24
      %p35 = scmp.ge.s32.totalorder %s34, 4
      %s36 = scalar_select %p35, 0, %s34
      %p37 = scmp.eq.s32.totalorder %s24, 3
      %s38 = scalar_select %p37, 0, %s25
      %p39 = scmp.eq.s32.totalorder %s36, 3
      %s40 = scalar_select %p39, 0, %s32
      %s41 = ssub.s32 %s38, %s40
      %p42 = scmp.eq.s32.totalorder %s41, 0
      %s44 = sadd.s32 %s43, 1
      %s45 = scalar_select %p42, %s43, %s44
      %p48 = pneg %p42
      %p49 = scmp.eq.s32.totalorder %s17, 3
      %p50 = por %p48, %p49
      %p51 = scmp.ne.s32.totalorder %s43, %s46
      %p52 = scmp.eq.s32.totalorder %s17, 0
      %p53 = por %p51, %p52
      %p54 = scmp.ne.s32.totalorder %s43, %s46
      %p55 = scmp.eq.s32.totalorder %s22, 3
      %p56 = por %p54, %p55
      %p57 = scmp.ne.s32.totalorder %s46, %s47
      %p58 = scmp.eq.s32.totalorder %s22, 0
      %p59 = por %p57, %p58
      %p60 = scmp.ne.s32.totalorder %s46, %s47
      %p61 = scmp.eq.s32.totalorder %s23, 3
      %p62 = por %p60, %p61
      %p64 = scmp.ne.s32.totalorder %s47, %s63
      %p65 = scmp.eq.s32.totalorder %s23, 0
      %p66 = por %p64, %p65
      %s68 = sadd.s32 %s67, 1
      %p71 = scmp.eq.s32.totalorder %s17, 3
      %p72 = scmp.ne.s32.totalorder %s67, %s69
      %p73 = scmp.eq.s32.totalorder %s17, 0
      %p74 = por %p72, %p73
      %p75 = scmp.ne.s32.totalorder %s67, %s69
      %p76 = scmp.eq.s32.totalorder %s22, 3
      %p77 = por %p75, %p76
      %p78 = scmp.ne.s32.totalorder %s69, %s70
      %p79 = scmp.eq.s32.totalorder %s22, 0
      %p80 = por %p78, %p79
      %p81 = scmp.ne.s32.totalorder %s69, %s70
      %p82 = scmp.eq.s32.totalorder %s23, 3
      %p83 = por %p81, %p82
      %p85 = scmp.ne.s32.totalorder %s70, %s84
      %p86 = scmp.eq.s32.totalorder %s23, 0
      %p87 = por %p85, %p86
      %s89 = sadd.s32 %s88, 1
      %p92 = scmp.eq.s32.totalorder %s17, 3
      %p93 = scmp.ne.s32.totalorder %s88, %s90
      %p94 = scmp.eq.s32.totalorder %s17, 0
      %p95 = por %p93, %p94
      %p96 = scmp.ne.s32.totalorder %s88, %s90
      %p97 = scmp.eq.s32.totalorder %s22, 3
      %p98 = por %p96, %p97
      %p99 = scmp.ne.s32.totalorder %s90, %s91
      %p100 = scmp.eq.s32.totalorder %s22, 0
      %p101 = por %p99, %p100
      %p102 = scmp.ne.s32.totalorder %s90, %s91
      %p103 = scmp.eq.s32.totalorder %s23, 3
      %p104 = por %p102, %p103
      %p106 = scmp.ne.s32.totalorder %s91, %s105
      %p107 = scmp.eq.s32.totalorder %s23, 0
      %p108 = por %p106, %p107
      %s110 = sadd.s32 %s109, 1
      %p113 = scmp.eq.s32.totalorder %s17, 3
      %p114 = scmp.ne.s32.totalorder %s109, %s111
      %p115 = scmp.eq.s32.totalorder %s17, 0
      %p116 = por %p114, %p115
      %p117 = scmp.ne.s32.totalorder %s109, %s111
      %p118 = scmp.eq.s32.totalorder %s22, 3
      %p119 = por %p117, %p118
      %p120 = scmp.ne.s32.totalorder %s111, %s112
      %p121 = scmp.eq.s32.totalorder %s22, 0
      %p122 = por %p120, %p121
      %p123 = scmp.ne.s32.totalorder %s111, %s112
      %p124 = scmp.eq.s32.totalorder %s23, 3
      %p125 = por %p123, %p124
      %p127 = scmp.ne.s32.totalorder %s112, %s126
      %p128 = scmp.eq.s32.totalorder %s23, 0
      %p129 = por %p127, %p128
      %s131 = sadd.s32 %s130, 1
      %p134 = scmp.eq.s32.totalorder %s17, 3
      %p135 = scmp.ne.s32.totalorder %s130, %s132
      %p136 = scmp.eq.s32.totalorder %s17, 0
      %p137 = por %p135, %p136
      %p138 = scmp.ne.s32.totalorder %s130, %s132
      %p139 = scmp.eq.s32.totalorder %s22, 3
      %p140 = por %p138, %p139
      %p141 = scmp.ne.s32.totalorder %s132, %s133
      %p142 = scmp.eq.s32.totalorder %s22, 0
      %p143 = por %p141, %p142
      %p144 = scmp.ne.s32.totalorder %s132, %s133
      %p145 = scmp.eq.s32.totalorder %s23, 3
      %p146 = por %p144, %p145
      %p148 = scmp.ne.s32.totalorder %s133, %s147
      %p149 = scmp.eq.s32.totalorder %s23, 0
      %p150 = por %p148, %p149
      %s152 = sadd.s32 %s151, 1
      %p155 = scmp.eq.s32.totalorder %s17, 3
      %p156 = scmp.ne.s32.totalorder %s151, %s153
      %p157 = scmp.eq.s32.totalorder %s17, 0
      %p158 = por %p156, %p157
      %p159 = scmp.ne.s32.totalorder %s151, %s153
      %p160 = scmp.eq.s32.totalorder %s22, 3
      %p161 = por %p159, %p160
      %p162 = scmp.ne.s32.totalorder %s153, %s154
      %p163 = scmp.eq.s32.totalorder %s22, 0
      %p164 = por %p162, %p163
      %p165 = scmp.ne.s32.totalorder %s153, %s154
      %p166 = scmp.eq.s32.totalorder %s23, 3
      %p167 = por %p165, %p166
      %p169 = scmp.ne.s32.totalorder %s154, %s168
      %p170 = scmp.eq.s32.totalorder %s23, 0
      %p171 = por %p169, %p170
      %p172 = scmp.eq.s32.totalorder %s24, 3
      %s173 = scalar_select %p172, %s25, 0
      %p174 = scmp.eq.s32.totalorder %s36, 3
      %s175 = scalar_select %p174, %s32, 0
      %s176 = ssub.s32 %s173, %s175
      %p177 = scmp.eq.s32.totalorder %s176, 0
      %s179 = sadd.s32 %s178, 1
      %s180 = scalar_select %p177, %s178, %s179
      %p183 = pneg %p177
      %p184 = scmp.eq.s32.totalorder %s17, 3
      %p185 = por %p183, %p184
      %p186 = scmp.ne.s32.totalorder %s178, %s181
      %p187 = scmp.eq.s32.totalorder %s17, 0
      %p188 = por %p186, %p187
      %p189 = scmp.ne.s32.totalorder %s178, %s181
      %p190 = scmp.eq.s32.totalorder %s22, 3
      %p191 = por %p189, %p190
      %p192 = scmp.ne.s32.totalorder %s181, %s182
      %p193 = scmp.eq.s32.totalorder %s22, 0
      %p194 = por %p192, %p193
      %p195 = scmp.ne.s32.totalorder %s181, %s182
      %p196 = scmp.eq.s32.totalorder %s23, 3
      %p197 = por %p195, %p196
      %p199 = scmp.ne.s32.totalorder %s182, %s198
      %p200 = scmp.eq.s32.totalorder %s23, 0
      %p201 = por %p199, %p200
      %p202 = scmp.le.s32.totalorder 1, %s17
      %p203 = scmp.lt.s32.totalorder %s17, 5
      %p204 = pnand %p202, %p203
      %p205 = pneg %p204
      // Predicated region
      $region9: #{tpu_custom_call.1} parent=5 // pred_check
        _
      $region10: #{tpu_custom_call.1} parent=5 // pred_check_branch
        %207 = sbr.rel (%p204) target = $region12
      $region11: #{tpu_custom_call.1} parent=5 // pred_region
        %s208 = ssub.s32 %s17, 1
        // Predicated region
        $region13: #{tpu_custom_call.1} parent=11 // pred_check
          %p209 = pneg %p80
        $region14: #{tpu_custom_call.1} parent=11 // pred_check_branch
          %211 = sbr.rel (%p209) target = $region16
        $region15: #{tpu_custom_call.1} parent=11 // pred_region
          %s213 = ssub.s32 16, 16
          %214 = vsyncadd [#allocation6], %s213
          %s216 = sshll.u32 [#allocation5], 4
          %s217 = int_to_ptr.vmem [resolvable:$true] %s216
          %219 = dma.hbm_to_vmem [thread:$0]  %s1, 16, %s217, [#allocation6]
        $region16: #{tpu_custom_call.1} parent=11 // pred_fallthru
          _
        // Predicated region
        $region17: #{tpu_custom_call.1} parent=11 // pred_check
          %p220 = pneg %p101
        $region18: #{tpu_custom_call.1} parent=11 // pred_check_branch
          %222 = sbr.rel (%p220) target = $region20
        $region19: #{tpu_custom_call.1} parent=11 // pred_region
          _
        $region20: #{tpu_custom_call.1} parent=11 // pred_fallthru
          _
        // Predicated region
        $region21: #{tpu_custom_call.1} parent=11 // pred_check
          %p223 = pneg %p122
        $region22: #{tpu_custom_call.1} parent=11 // pred_check_branch
          %225 = sbr.rel (%p223) target = $region24
        $region23: #{tpu_custom_call.1} parent=11 // pred_region
          _
        $region24: #{tpu_custom_call.1} parent=11 // pred_fallthru
          _
        // Predicated region
        $region25: #{tpu_custom_call.1} parent=11 // pred_check
          %p226 = pneg %p143
        $region26: #{tpu_custom_call.1} parent=11 // pred_check_branch
          %228 = sbr.rel (%p226) target = $region28
        $region27: #{tpu_custom_call.1} parent=11 // pred_region
          %s230 = ssub.s32 512, 512
          %231 = vsyncadd [#allocation9], %s230
          %s232 = sshll.u32 [#allocation8], 4
          %s233 = int_to_ptr.vmem [resolvable:$true] %s232
          %238 = dma.hbm_to_vmem [thread:$0]  %s4, 512, %s233, [#allocation9], 128, 128, 8
        $region28: #{tpu_custom_call.1} parent=11 // pred_fallthru
          _
        // Predicated region
        $region29: #{tpu_custom_call.1} parent=11 // pred_check
          %p239 = pneg %p164
        $region30: #{tpu_custom_call.1} parent=11 // pred_check_branch
          %241 = sbr.rel (%p239) target = $region32
        $region31: #{tpu_custom_call.1} parent=11 // pred_region
          _
        $region32: #{tpu_custom_call.1} parent=11 // pred_fallthru
          _
      $region12: #{tpu_custom_call.1} parent=5 // pred_fallthru
        _
      %p242 = scmp.lt.s32.totalorder %s17, 4
      // Predicated region
      $region33: #{tpu_custom_call.1} parent=5 // pred_check
        %p243 = pneg %p242
      $region34: #{tpu_custom_call.1} parent=5 // pred_check_branch
        %245 = sbr.rel (%p243) target = $region36
      $region35: #{tpu_custom_call.1} parent=5 // pred_region
        // Predicated region
        $region37: #{tpu_custom_call.1} parent=35 // pred_check
          %p246 = pneg %p53
        $region38: #{tpu_custom_call.1} parent=35 // pred_check_branch
          %248 = sbr.rel (%p246) target = $region40
        $region39: #{tpu_custom_call.1} parent=35 // pred_region
          %p249 = scmp.eq.s32.totalorder %s24, 3
          %s250 = scalar_select %p249, 0, %s25
          %p251 = scmp.lt.s32.totalorder %s250, 0
          %s252 = scalar_select %p251, %s250, 0
          %s253 = smul.addr %s252, 4
          %s254 = scalar_lea.vmem %s0, %s253
          %p255 = scmp.eq.s32.totalorder %s24, 3
          %s256 = scalar_select %p255, 0, %s25
        $region40: #{tpu_custom_call.1} parent=35 // pred_fallthru
          _
      $region36: #{tpu_custom_call.1} parent=5 // pred_fallthru
        _
      %p257 = scmp.le.s32.totalorder 1, %s17
      %p258 = scmp.lt.s32.totalorder %s17, 5
      %p259 = pnand %p257, %p258
      %p260 = pneg %p259
      // Predicated region
      $region41: #{tpu_custom_call.1} parent=5 // pred_check
        _
      $region42: #{tpu_custom_call.1} parent=5 // pred_check_branch
        %262 = sbr.rel (%p259) target = $region44
      $region43: #{tpu_custom_call.1} parent=5 // pred_region
        %s263 = ssub.s32 %s17, 1
        // Predicated region
        $region45: #{tpu_custom_call.1} parent=43 // pred_check
          %p264 = pneg %p80
        $region46: #{tpu_custom_call.1} parent=43 // pred_check_branch
          %266 = sbr.rel (%p264) target = $region48
        $region47: #{tpu_custom_call.1} parent=43 // pred_region
          %267 = dma.done [#allocation6], 16
        $region48: #{tpu_custom_call.1} parent=43 // pred_fallthru
          _
        // Predicated region
        $region49: #{tpu_custom_call.1} parent=43 // pred_check
          %p268 = pneg %p143
        $region50: #{tpu_custom_call.1} parent=43 // pred_check_branch
          %270 = sbr.rel (%p268) target = $region52
        $region51: #{tpu_custom_call.1} parent=43 // pred_region
          %271 = dma.done [#allocation9], 512
        $region52: #{tpu_custom_call.1} parent=43 // pred_fallthru
          _
        %p272 = scmp.eq.s32.totalorder %s26, 3
        %s273 = scalar_select %p272, 0, %s27
        %p274 = scmp.lt.s32.totalorder %s273, 0
        %s275 = scalar_select %p274, %s273, 0
        %s276 = smul.addr %s275, 4
        %s277 = scalar_lea.vmem %s0, %s276
        %p278 = pneg %p59
        %p279 = pneg %p56
        %p280 = pneg %p80
        %p281 = pneg %p77
        %p282 = pneg %p101
        %p283 = pneg %p98
        %p284 = pneg %p122
        %p285 = pneg %p119
        %p286 = pneg %p143
        %p287 = pneg %p140
        %p288 = pneg %p164
        %p289 = pneg %p161
        %p290 = pneg %p194
        %p291 = pneg %p191
        %s292 = sand.u32 %s181, 1
        %s293 = scalar_lea.sflag [#allocation7], %s292
        %s294 = sand.u32 %s181, 1
        %s295 = smul.addr %s294, 8
        %s296 = scalar_lea.vmem [#allocation10], %s295
        %p297 = scmp.eq.s32.totalorder %s26, 3
        %s298 = scalar_select %p297, 0, %s27
        %p299 = scmp.lt.s32.totalorder %s298, 0
        %s300 = scalar_select %p299, %s298, 0
        %s301 = smul.addr %s300, 4
        %s302 = scalar_lea.vmem %s0, %s301
        %p303 = scmp.eq.s32.totalorder %s26, 3
        %s304 = scalar_select %p303, 0, %s27
        %p305 = scmp.eq.s32.totalorder %s26, 3
        %s306 = scalar_select %p305, %s27, 0
        %s308 = smul.u32 %s27, 128
        %p309 = scmp.lt.s32.totalorder %s26, 0
        %s310 = ssub.s32 0, %s26
        %s311 = scalar_select %p309, %s310, %s26
        %s312 = sand.u32 %s311, 1
        %s313 = ssub.s32 0, %s312
        %s314 = scalar_select %p309, %s313, %s312
        %p315 = scmp.ne.s32.totalorder %s314, 0
        %p316 = scmp.lt.s32.totalorder %s314, 0
        %p317 = pnand %p316, %p315
        %p318 = pneg %p317
        %s319 = sadd.s32 %s314, 2
        %s320 = scalar_select %p318, %s319, %s314
        %s321 = ssub.s32 1, %s320
        %p322 = scmp.eq.s32.totalorder %s26, 0
        %p323 = scmp.eq.s32.totalorder %s27, 0
        %p324 = pnand %p322, %p323
        %p325 = pneg %p324
        // Predicated region
        $region53: #{tpu_custom_call.1} parent=43 // pred_check
          _
        $region54: #{tpu_custom_call.1} parent=43 // pred_check_branch
          %327 = sbr.rel (%p324) target = $region56
        $region55: #{tpu_custom_call.1} parent=43 // pred_region
          %v328 = vld [vmem:[%s2] sm:$0xff]
          %v329 = vld [vmem:[%s2 + $0x8] sm:$0xff]
          %330 = vst [vmem:[#allocation2] sm:$0xff] %v328
          %331 = vst [vmem:[#allocation2 + $0x8] sm:$0xff] %v329
        $region56: #{tpu_custom_call.1} parent=43 // pred_fallthru
          _
        %p332 = scmp.lt.s32.totalorder %s26, 3
        %p333 = pnand %p323, %p332
        %p334 = pneg %p333
        // Predicated region
        $region57: #{tpu_custom_call.1} parent=43 // pred_check
          _
        $region58: #{tpu_custom_call.1} parent=43 // pred_check_branch
          %336 = sbr.rel (%p333) target = $region60
        $region59: #{tpu_custom_call.1} parent=43 // pred_region
          %s337 = smul.u32 %s320, 16
          %s338 = scalar_lea.vmem [#allocation2], %s337
          %v339 = vld [vmem:[%s338] sm:$0xff]
          %v340 = vld [vmem:[%s338 + $0x8] sm:$0xff]
          %v341 = vld [vmem:[#allocation5] sm:$0x1]
          %v343 = vlaneseq
          %v344 = vshrl.u32 %v343, 7
          %v345 = vsub.s32 0, %v344
          %v346 = vrot.slane %v341, %v345
          %v348 = vmul.f32 %v339, %v346
          %v349 = vmul.f32 %v340, %v346
          %v350 = vpack.c.bf16 %v349, %v348
          %351 = vst [vmem:[#allocation3] sm:$0xff] %v350
        $region60: #{tpu_custom_call.1} parent=43 // pred_fallthru
          _
        %s352 = sshra.s32 %s308, 7
        %s353 = sand.u32 %s308, 127
        %s354 = smul.u32 %s320, 16
        %s355 = sadd.s32 %s352, %s354
        %s356 = scalar_lea.vmem [#allocation2], %s355
        %v357 = vld [vmem:[%s356] sm:$0xff]
        %v358 = vld [vmem:[%s356 + $0x8] sm:$0xff]
        %s359 = smul.u32 %s26, 16
        %s360 = scalar_lea.vmem %s3, %s359
        %v361 = vld [vmem:[%s360] sm:$0xff]
        %v362 = vld [vmem:[%s360 + $0x8] sm:$0xff]
        %364 = vset.pattern.permute.xlu0 0
        %365 = vperm.xlu0 %364, %v361
        %v366 = vpop.permute.xlu0 %365
        %369 = vset.pattern.permute.xlu0 0
        %370 = vperm.xlu0 %369, %v362
        %v371 = vpop.permute.xlu0 %370
        %v373 = vmul.f32 %v357, %v366
        %v374 = vmul.f32 %v358, %v371
        %v375 = vtanh.pop %v373
        %v376 = vtanh.pop %v374
        // Predicated region
        $region61: #{tpu_custom_call.1} parent=43 // pred_check
          %p377 = pneg %p322
        $region62: #{tpu_custom_call.1} parent=43 // pred_check_branch
          %379 = sbr.rel (%p377) target = $region64
        $region63: #{tpu_custom_call.1} parent=43 // pred_region
          %v380 = vld [vmem:[%s5] sm:$0xff]
          %382 = vset.pattern.permute.xlu0 0
          %383 = vperm.xlu0 %382, %v380
          %v384 = vpop.permute.xlu0 %383
          %s386 = scalar_lea.vmem [#allocation4], %s352
          %387 = vst [vmem:[%s386] sm:$0xff] %v384
        $region64: #{tpu_custom_call.1} parent=43 // pred_fallthru
          _
        %s388 = scalar_lea.vmem [#allocation4], %s352
        %v389 = vld [vmem:[%s388] sm:$0xff]
        %s390 = smul.u32 %s26, 8
        %s391 = scalar_lea.vmem [#allocation8], %s390
        %v392 = vld [vmem:[%s391] sm:$0xff]
        %vm393 = vcmask 130048
        %v395 = vsel %vm393, %v392, 0
        %397 = vmatprep.subr.mxu0 0.0
        %398 = vmatpush1.msra.mxu0 %v375
        %399 = vmatprep.subr.mxu0 0.0
        %400 = vmatpush1.msra.mxu0 %v376
        %401 = vmatprep.subr.mxu0 0.0
        %402 = vmatpush1.msra.mxu0 0.0
        %403 = vmatprep.subr.mxu0 0.0
        %404 = vmatpush1.msra.mxu0 0.0
        %405 = vmatprep.subr.mxu0 0.0
        %406 = vmatpush1.msra.mxu0 0.0
        %407 = vmatprep.subr.mxu0 0.0
        %408 = vmatpush1.msra.mxu0 0.0
        %409 = vmatprep.subr.mxu0 0.0
        %410 = vmatpush1.msra.mxu0 0.0
        %411 = vmatprep.subr.mxu0 0.0
        %412 = vmatpush1.msra.mxu0 0.0
        %413 = vmatprep.subr.mxu0 0.0
        %414 = vmatpush1.msra.mxu0 0.0
        %415 = vmatprep.subr.mxu0 0.0
        %416 = vmatpush1.msra.mxu0 0.0
        %417 = vmatprep.subr.mxu0 0.0
        %418 = vmatpush1.msra.mxu0 0.0
        %419 = vmatprep.subr.mxu0 0.0
        %420 = vmatpush1.msra.mxu0 0.0
        %421 = vmatprep.subr.mxu0 0.0
        %422 = vmatpush1.msra.mxu0 0.0
        %423 = vmatprep.subr.mxu0 0.0
        %424 = vmatpush1.msra.mxu0 0.0
        %425 = vmatprep.subr.mxu0 0.0
        %426 = vmatpush1.msra.mxu0 0.0
        %427 = vmatprep.subr.mxu0 0.0
        %428 = vmatpush1.msra.mxu0 0.0
        %429 = vmatprep.subr.mxu0 0.0
        %430 = vmatpush1.msra.mxu0 0.0
        %431 = vmatprep.subr.mxu0 0.0
        %432 = vmatpush1.msra.mxu0 0.0
        %433 = vmatprep.subr.mxu0 0.0
        %434 = vmatpush1.msra.mxu0 0.0
        %435 = vmatprep.subr.mxu0 0.0
        %436 = vmatpush1.msra.mxu0 0.0
        %437 = vmatprep.subr.mxu0 0.0
        %438 = vmatpush1.msra.mxu0 0.0
        %439 = vmatprep.subr.mxu0 0.0
        %440 = vmatpush1.msra.mxu0 0.0
        %441 = vmatprep.subr.mxu0 0.0
        %442 = vmatpush1.msra.mxu0 0.0
        %443 = vmatprep.subr.mxu0 0.0
        %444 = vmatpush1.msra.mxu0 0.0
        %445 = vmatprep.subr.mxu0 0.0
        %446 = vmatpush1.msra.mxu0 0.0
        %447 = vmatprep.subr.mxu0 0.0
        %448 = vmatpush1.msra.mxu0 0.0
        %449 = vmatprep.subr.mxu0 0.0
        %450 = vmatpush1.msra.mxu0 0.0
        %451 = vmatprep.subr.mxu0 0.0
        %452 = vmatpush1.msra.mxu0 0.0
        %453 = vmatprep.subr.mxu0 0.0
        %454 = vmatpush1.msra.mxu0 0.0
        %455 = vmatprep.subr.mxu0 0.0
        %456 = vmatpush1.msra.mxu0 0.0
        %457 = vmatprep.subr.mxu0 0.0
        %458 = vmatpush1.msra.mxu0 0.0
        %459 = vmatprep.subr.mxu0 0.0
        %460 = vmatpush1.msra.mxu0 0.0
        %461 = vmatprep.mubr.f32.mxu0 0.0
        %462 = vmatmul.mubr.f32.gmra.mrb[0].mxu0 %v395
        %v463 = vpop.f32.mrb[0].mxu0
        %v464 = vadd.f32 0.0, %v463
        %v465 = vpop.f32.mrb[0].mxu0
        %466 = vdwg.mxu0
        %v467 = vadd.f32 %v389, %v464
        %468 = vst [vmem:[%s388] sm:$0xff] %v467
        // Predicated region
        $region65: #{tpu_custom_call.1} parent=43 // pred_check
          %p469 = pneg %p332
        $region66: #{tpu_custom_call.1} parent=43 // pred_check_branch
          %471 = sbr.rel (%p469) target = $region68
        $region67: #{tpu_custom_call.1} parent=43 // pred_region
          %v472 = vld [vmem:[#allocation3] sm:$0xff]
          %v473 = vld [vmem:[%s302] sm:$0xf]
          %v474 = vld [vmem:[%s302 + $0x4] sm:$0xf]
          %v475 = vld [vmem:[%s302 + $0x8] sm:$0xf]
          %v476 = vld [vmem:[%s302 + $0xc] sm:$0xf]
          %v477 = vld [vmem:[%s302 + $0x10] sm:$0xf]
          %v478 = vld [vmem:[%s302 + $0x14] sm:$0xf]
          %v479 = vld [vmem:[%s302 + $0x18] sm:$0xf]
          %v480 = vld [vmem:[%s302 + $0x1c] sm:$0xf]
          %v481 = vld [vmem:[%s302 + $0x20] sm:$0xf]
          %v482 = vld [vmem:[%s302 + $0x24] sm:$0xf]
          %v483 = vld [vmem:[%s302 + $0x28] sm:$0xf]
          %v484 = vld [vmem:[%s302 + $0x2c] sm:$0xf]
          %v485 = vld [vmem:[%s302 + $0x30] sm:$0xf]
          %v486 = vld [vmem:[%s302 + $0x34] sm:$0xf]
          %v487 = vld [vmem:[%s302 + $0x38] sm:$0xf]
          %v488 = vld [vmem:[%s302 + $0x3c] sm:$0xf]
          %v505 = vunpack.c.l.b16 %v473
          %v506 = vunpack.c.l.b16 %v474
          %v507 = vunpack.c.l.b16 %v475
          %v508 = vunpack.c.l.b16 %v476
          %v509 = vunpack.c.l.b16 %v477
          %v510 = vunpack.c.l.b16 %v478
          %v511 = vunpack.c.l.b16 %v479
          %v512 = vunpack.c.l.b16 %v480
          %v513 = vunpack.c.l.b16 %v481
          %v514 = vunpack.c.l.b16 %v482
          %v515 = vunpack.c.l.b16 %v483
          %v516 = vunpack.c.l.b16 %v484
          %v517 = vunpack.c.l.b16 %v485
          %v518 = vunpack.c.l.b16 %v486
          %v519 = vunpack.c.l.b16 %v487
          %v520 = vunpack.c.l.b16 %v488
          %v521 = vpack.c.b16 %v506, %v505
          %v522 = vpack.c.b16 %v508, %v507
          %v523 = vpack.c.b16 %v510, %v509
          %v524 = vpack.c.b16 %v512, %v511
          %v525 = vpack.c.b16 %v514, %v513
          %v526 = vpack.c.b16 %v516, %v515
          %v527 = vpack.c.b16 %v518, %v517
          %v528 = vpack.c.b16 %v520, %v519
          %537 = vmatprep.subr.bf16.mxu0 0
          %538 = vmatpush1.bf16.msra.mxu0 %v521
          %539 = vmatprep.subr.bf16.mxu0 0
          %540 = vmatpush1.bf16.msra.mxu0 %v522
          %541 = vmatprep.subr.bf16.mxu0 0
          %542 = vmatpush1.bf16.msra.mxu0 %v523
          %543 = vmatprep.subr.bf16.mxu0 0
          %544 = vmatpush1.bf16.msra.mxu0 %v524
          %545 = vmatprep.subr.bf16.mxu0 0
          %546 = vmatpush1.bf16.msra.mxu0 %v525
          %547 = vmatprep.subr.bf16.mxu0 0
          %548 = vmatpush1.bf16.msra.mxu0 %v526
          %549 = vmatprep.subr.bf16.mxu0 0
          %550 = vmatpush1.bf16.msra.mxu0 %v527
          %551 = vmatprep.subr.bf16.mxu0 0
          %552 = vmatpush1.bf16.msra.mxu0 %v528
          %553 = vmatprep.subr.bf16.mxu0 0
          %554 = vmatpush1.bf16.msra.mxu0 0
          %555 = vmatprep.subr.bf16.mxu0 0
          %556 = vmatpush1.bf16.msra.mxu0 0
          %557 = vmatprep.subr.bf16.mxu0 0
          %558 = vmatpush1.bf16.msra.mxu0 0
          %559 = vmatprep.subr.bf16.mxu0 0
          %560 = vmatpush1.bf16.msra.mxu0 0
          %561 = vmatprep.subr.bf16.mxu0 0
          %562 = vmatpush1.bf16.msra.mxu0 0
          %563 = vmatprep.subr.bf16.mxu0 0
          %564 = vmatpush1.bf16.msra.mxu0 0
          %565 = vmatprep.subr.bf16.mxu0 0
          %566 = vmatpush1.bf16.msra.mxu0 0
          %567 = vmatprep.subr.bf16.mxu0 0
          %568 = vmatpush1.bf16.msra.mxu0 0
          %569 = vmatprep.mubr.bf16.mxu0 0
          %570 = vmatmul.mubr.bf16.gmra.mrb[0].mxu0 %v472
          %v571 = vpop.f32.mrb[0].mxu0
          %v572 = vadd.f32 0.0, %v571
          %v573 = vpop.f32.mrb[0].mxu0
          %v574 = vpop.f32.mrb[0].mxu0
          %v575 = vadd.f32 0.0, %v574
          %v576 = vpop.f32.mrb[0].mxu0
          %577 = vdwg.mxu0
          %s578 = smul.u32 %s321, 16
          %s579 = sadd.s32 %s352, %s578
          %s580 = scalar_lea.vmem [#allocation2], %s579
          %581 = vst [vmem:[%s580] sm:$0xff] %v572
          %582 = vst [vmem:[%s580 + $0x8] sm:$0xff] %v575
        $region68: #{tpu_custom_call.1} parent=43 // pred_fallthru
          _
        %p583 = scmp.eq.s32.totalorder %s26, 3
        // Predicated region
        $region69: #{tpu_custom_call.1} parent=43 // pred_check
          %p584 = pneg %p583
        $region70: #{tpu_custom_call.1} parent=43 // pred_check_branch
          %586 = sbr.rel (%p584) target = $region72
        $region71: #{tpu_custom_call.1} parent=43 // pred_region
          %v587 = vld [vmem:[%s388] sm:$0xff]
          %v588 = vrot.slane %v587, 4
          %v589 = vmax.f32 %v587, %v588
          %v590 = vrot.slane %v589, 2
          %v591 = vmax.f32 %v589, %v590
          %v592 = vrot.slane %v591, 1
          %v593 = vmax.f32 %v591, %v592
          %v594 = vsub.f32 %v587, %v593
          %v595 = vmul.f32 %v594, 1.442695
          %v596 = vpow.pop %v595
          %v597 = vrot.slane %v596, 4
          %v598 = vadd.f32 %v596, %v597
          %v599 = vrot.slane %v598, 2
          %v600 = vadd.f32 %v598, %v599
          %v601 = vrot.slane %v600, 1
          %v602 = vadd.f32 %v600, %v601
          %v603 = vlog2.pop %v602
          %v604 = vmul.f32 %v603, 0.6931472
          %v605 = vsub.f32 %v594, %v604
          %606 = vst [vmem:[%s296] sm:$0xff] %v605
        $region72: #{tpu_custom_call.1} parent=43 // pred_fallthru
          _
        %s607 = sand.u32 %s181, 1
        %s608 = scalar_lea.sflag [#allocation7], %s607
        %s609 = sand.u32 %s181, 1
        %s610 = smul.addr %s609, 8
        %s611 = scalar_lea.vmem [#allocation10], %s610
        // Predicated region
        $region73: #{tpu_custom_call.1} parent=43 // pred_check
          %p612 = pneg %p191
        $region74: #{tpu_custom_call.1} parent=43 // pred_check_branch
          %614 = sbr.rel (%p612) target = $region76
        $region75: #{tpu_custom_call.1} parent=43 // pred_region
          %p615 = scmp.eq.s32.totalorder %s26, 3
          %s616 = scalar_select %p615, %s27, 0
          %s618 = ssub.s32 128, 128
          %619 = vsyncadd %s608, %s618
          %s620 = smul.addr %s616, 128
          %s621 = scalar_lea.hbm %s6, %s620
          %s623 = sshll.u32 %s611, 4
          %s624 = int_to_ptr.vmem [resolvable:$true] %s623
          %626 = dma.vmem_to_hbm [thread:$0]  %s624, 128, %s621, %s608
        $region76: #{tpu_custom_call.1} parent=43 // pred_fallthru
          _
      $region44: #{tpu_custom_call.1} parent=5 // pred_fallthru
        _
      %p627 = scmp.le.s32.totalorder 2, %s17
      // Predicated region
      $region77: #{tpu_custom_call.1} parent=5 // pred_check
        %p628 = pneg %p627
      $region78: #{tpu_custom_call.1} parent=5 // pred_check_branch
        %630 = sbr.rel (%p628) target = $region80
      $region79: #{tpu_custom_call.1} parent=5 // pred_region
        %s631 = ssub.s32 %s17, 2
        // Predicated region
        $region81: #{tpu_custom_call.1} parent=79 // pred_check
          %p632 = pneg %p197
        $region82: #{tpu_custom_call.1} parent=79 // pred_check_branch
          %634 = sbr.rel (%p632) target = $region84
        $region83: #{tpu_custom_call.1} parent=79 // pred_region
          %s635 = sand.u32 %s182, 1
          %s636 = scalar_lea.sflag [#allocation7], %s635
          %s637 = sand.u32 %s182, 1
          %s638 = smul.addr %s637, 8
          %s639 = scalar_lea.vmem [#allocation10], %s638
          %640 = dma.done %s636, 128
        $region84: #{tpu_custom_call.1} parent=79 // pred_fallthru
          _
      $region80: #{tpu_custom_call.1} parent=5 // pred_fallthru
        _
    $region6: #{tpu_custom_call.1} parent=1 // loop_footer
      %s21 = sadd.s32 1, %s17
    $region7: #{tpu_custom_call.1} parent=1 // loop_footer_branch
      %16 = sbr.rel target = $region3
    $region8: #{tpu_custom_call.1} parent=1 // loop_exit
      _
    %641 = vsyncpa [#allocation6], 1
    %s642 = scalar_lea.sflag [#allocation6], 1
    %643 = vsyncpa %s642, 1
    %644 = vsyncpa [#allocation9], 1
    %645 = vsyncpa [#allocation7], 1
    %s646 = scalar_lea.sflag [#allocation7], 1
    %647 = vsyncpa %s646, 1

</llo_original>
